<compile_context>
chip_gen: v7x
topology: tpu7x:2x2x1
jax: 0.10.0
libtpu: 0.0.40
codegen_flags: <defaults>
</compile_context>

<pallas_src>
import functools

import jax
import jax.numpy as jnp
from jax.experimental import pallas as pl
from jax.experimental.pallas import tpu as pltpu


def _vmem_limit_bytes():
    """Generation-aware VMEM limit: physical capacity minus headroom."""
    try:
        cap = int(pltpu.get_tpu_info().vmem_capacity_bytes)
    except Exception:
        cap = 64 * 1024 * 1024
    cap = min(cap, 128 * 1024 * 1024)
    return max(cap - 16 * 1024 * 1024, 32 * 1024 * 1024)


def _recip(x):
    # EUP approximate reciprocal + one Newton refinement (~f32 accuracy, cheap).
    r = pl.reciprocal(x, approx=True)
    return r * (2.0 - x * r)


def _pick_c_tile_matmul(C):
    for cand in (2048, 1024, 512, 256, 128):
        if C % cand == 0:
            return cand
    return C


def _pick_c_tile_loss(C):
    # The loss is a pure HBM stream; big lane tiles amortize ~0.35us/step overhead.
    for cand in (4096, 2048, 1024, 512, 256, 128):
        if C % cand == 0:
            return cand
    return 2048 if C > 4096 else C   # masked remainder tile / single full tile


def _pick_b_tile(B):
    if B % 8 != 0:
        return B
    for cand in (256, 128, 64, 32, 16, 8):
        if B % cand == 0 and B // cand >= 2:
            return cand
    return B


# -----------------------------------------------------------------------------
# ArcLinear producer:
#   nembedding = x / (||x||_2(row) + 1e-5) * s
#   _weight    = w / (||w||_2(col) + 1e-5)      (emitted in bf16)
#   fc7        = nembedding @ _weight           (bf16 MXU feed, f32 accumulate)
# -----------------------------------------------------------------------------
def _l2norm_rows_kernel(x_ref, nemb_ref, nemb_bf16_ref, *, s):
    x = x_ref[...]                                                    # (TB, D) f32
    inv = _recip(jnp.sqrt(jnp.sum(x * x, axis=1, keepdims=True)) + 1e-5)
    nemb = x * (inv * s)
    nemb_ref[...] = nemb
    nemb_bf16_ref[...] = nemb.astype(jnp.bfloat16)


def _wnorm_kernel(w_ref, wn_ref):
    w = w_ref[...]                                                    # (D, TC) f32
    inv = _recip(jnp.sqrt(jnp.sum(w * w, axis=0, keepdims=True)) + 1e-5)
    wn_ref[...] = (w * inv).astype(wn_ref.dtype)                      # bf16 out


def _fc7_matmul_kernel(nemb_ref, wn_ref, fc7_ref):
    # Pure MXU work: both operands already bf16, no per-step casts/normalization.
    fc7_ref[...] = jnp.dot(nemb_ref[...], wn_ref[...],
                           preferred_element_type=jnp.float32)


def arc_linear_forward(x, weight, s=64.0, c_tile=None):
    """Returns (fc7, _weight, nembedding) — the `input` tuple ArcLoss expects.

    _weight (the normalized weight) is emitted as bf16: ArcLoss never reads it
    and halving its HBM writeback is a direct traffic win.
    """
    B, D = x.shape
    Dw, C = weight.shape
    assert D == Dw
    vmem = _vmem_limit_bytes()

    # --- nembedding (tiny; tiled over B so huge batches also stream) --------
    b_tile = 256 if (B > 256 and B % 256 == 0) else B
    nemb, nemb_bf16 = pl.pallas_call(
        functools.partial(_l2norm_rows_kernel, s=float(s)),
        out_shape=(jax.ShapeDtypeStruct((B, D), jnp.float32),
                   jax.ShapeDtypeStruct((B, D), jnp.bfloat16)),
        grid=(B // b_tile,),
        in_specs=[pl.BlockSpec((b_tile, D), lambda i: (i, 0))],
        out_specs=(pl.BlockSpec((b_tile, D), lambda i: (i, 0)),
                   pl.BlockSpec((b_tile, D), lambda i: (i, 0))),
        compiler_params=pltpu.CompilerParams(
            dimension_semantics=("parallel",), vmem_limit_bytes=vmem),
        cost_estimate=pl.CostEstimate(flops=4 * B * D, transcendentals=2 * B,
                                      bytes_accessed=10 * B * D),
    )(x)

    if c_tile is None:
        c_tile = _pick_c_tile_matmul(C)
    if C % c_tile != 0:
        c_tile = C
    grid_c = C // c_tile

    # --- pass 1: normalize + cast weight columns -> bf16 w_n ----------------
    w_n = pl.pallas_call(
        _wnorm_kernel,
        out_shape=jax.ShapeDtypeStruct((D, C), jnp.bfloat16),
        grid=(grid_c,),
        in_specs=[pl.BlockSpec((D, c_tile), lambda j: (0, j))],
        out_specs=pl.BlockSpec((D, c_tile), lambda j: (0, j)),
        compiler_params=pltpu.CompilerParams(
            dimension_semantics=("parallel",), vmem_limit_bytes=vmem),
        cost_estimate=pl.CostEstimate(flops=4 * D * C, transcendentals=C,
                                      bytes_accessed=6 * D * C),
    )(weight)

    # --- pass 2: pure-MXU matmul over "parallel" class tiles ----------------
    fc7 = pl.pallas_call(
        _fc7_matmul_kernel,
        out_shape=jax.ShapeDtypeStruct((B, C), jnp.float32),
        grid=(grid_c,),
        in_specs=[pl.BlockSpec((B, D), lambda j: (0, 0)),        # resident bf16 nemb
                  pl.BlockSpec((D, c_tile), lambda j: (0, j))],  # streamed bf16 w_n
        out_specs=pl.BlockSpec((B, c_tile), lambda j: (0, j)),
        compiler_params=pltpu.CompilerParams(
            dimension_semantics=("parallel",), vmem_limit_bytes=vmem),
        cost_estimate=pl.CostEstimate(
            flops=2 * B * D * C, transcendentals=0,
            bytes_accessed=2 * B * D + 2 * D * C + 4 * B * C),
    )(nemb_bf16, w_n)
    # TODO(synk): for very large B add a second "parallel" grid axis over B tiles.
    return fc7, w_n, nemb


# -----------------------------------------------------------------------------
# ArcLoss: substitute the margin logit at the target column + cross entropy
# (mean reduction) via an online logsumexp over large class tiles.
# -----------------------------------------------------------------------------
def _arc_loss_kernel(newzy_ref, fc7_ref, tgt_ref, perrow_ref,
                     m_sc, l_sc, cols_sc, *, num_classes):
    cj = pl.program_id(1)
    _, TC = fc7_ref.shape

    @pl.when(cj == 0)
    def _():
        m_sc[...] = jnp.full(m_sc.shape, -jnp.inf, dtype=m_sc.dtype)
        l_sc[...] = jnp.zeros(l_sc.shape, dtype=l_sc.dtype)
        cols_sc[...] = jax.lax.broadcasted_iota(jnp.int32, cols_sc.shape, 1)

    tile = fc7_ref[...]                                              # (TB, TC) f32
    cols = cols_sc[...] + cj * TC                                    # hoisted iota
    is_tgt = cols == tgt_ref[...]                                    # (TB, TC)
    mod = jnp.where(is_tgt, newzy_ref[...], tile)                    # margin logit swap
    mod = jnp.where(cols < num_classes, mod, -jnp.inf)               # mask padded cols

    # Online logsumexp across class tiles (flash-style, f32 accumulators).
    m_new = jnp.maximum(m_sc[...], jnp.max(mod, axis=1, keepdims=True))
    l_sc[...] = (l_sc[...] * jnp.exp(m_sc[...] - m_new)
                 + jnp.sum(jnp.exp(mod - m_new), axis=1, keepdims=True))
    m_sc[...] = m_new

    @pl.when(cj == pl.num_programs(1) - 1)
    def _():
        lse = m_sc[...] + jnp.log(l_sc[...])                         # (TB, 1)
        perrow_ref[...] = lse - newzy_ref[...]                       # per-row CE


def arc_loss_forward(inputs, target, m1=1.0, m2=0.5, m3=0.0, s=64.0,
                     c_tile=None, b_tile=None):
    """Pallas implementation of ArcLoss.forward(input, target) -> scalar loss."""
    fc7, _weight, _nembedding = inputs   # _weight / nembedding unused, as in torch
    B, C = fc7.shape
    tgt2d = target.reshape(B, 1).astype(jnp.int32)

    # Hoisted margin math (tiny (B,1) op, exact f32 acos); the kernel then only
    # substitutes new_zy at the target column and runs the online LSE.
    zy = jnp.take_along_axis(fc7, tgt2d, axis=1)                     # (B, 1)
    t = jnp.arccos(jnp.clip(zy / s, -1.0, 1.0)) * m1 + m2
    new_zy = ((jnp.cos(t) - m3) * s).astype(jnp.float32)             # (B, 1)

    if c_tile is None:
        c_tile = _pick_c_tile_loss(C)
    if b_tile is None:
        b_tile = _pick_b_tile(B)

    kernel = functools.partial(_arc_loss_kernel, num_classes=C)
    cost = pl.CostEstimate(flops=6 * B * C, transcendentals=B * C,
                           bytes_accessed=4 * B * C + 16 * B)

    per_row = pl.pallas_call(
        kernel,
        out_shape=jax.ShapeDtypeStruct((B, 1), jnp.float32),
        grid=(B // b_tile, pl.cdiv(C, c_tile)),
        in_specs=[pl.BlockSpec((b_tile, 1), lambda bi, cj: (bi, 0)),        # new_zy
                  pl.BlockSpec((b_tile, c_tile), lambda bi, cj: (bi, cj)),  # logits
                  pl.BlockSpec((b_tile, 1), lambda bi, cj: (bi, 0))],       # targets
        out_specs=pl.BlockSpec((b_tile, 1), lambda bi, cj: (bi, 0)),
        scratch_shapes=[pltpu.VMEM((b_tile, 1), jnp.float32),       # running max
                        pltpu.VMEM((b_tile, 1), jnp.float32),       # running sum-exp
                        pltpu.VMEM((b_tile, c_tile), jnp.int32)],   # hoisted iota
        compiler_params=pltpu.CompilerParams(
            dimension_semantics=("parallel", "arbitrary"),
            vmem_limit_bytes=_vmem_limit_bytes()),
        cost_estimate=cost,
    )(new_zy, fc7, tgt2d)

    return jnp.mean(per_row)                                         # 'mean' reduction


# -----------------------------------------------------------------------------
# Pure-JAX references
# -----------------------------------------------------------------------------
def _arc_linear_reference(x, weight, s=64.0):
    x_norm = jnp.linalg.norm(x, axis=1, keepdims=True) + 1e-5
    nemb = x / x_norm * s
    w_norm = jnp.linalg.norm(weight, axis=0, keepdims=True) + 1e-5
    w_n = weight / w_norm
    return nemb @ w_n, w_n, nemb


def _arc_loss_reference(fc7, target, m1=1.0, m2=0.5, m3=0.0, s=64.0):
    B = fc7.shape[0]
    rows = jnp.arange(B)
    zy = fc7[rows, target]
    t = jnp.arccos(zy / s) * m1 + m2
    new_zy = (jnp.cos(t) - m3) * s
    fc7_mod = fc7.at[rows, target].set(new_zy)
    lse = jax.nn.logsumexp(fc7_mod, axis=1)
    return jnp.mean(lse - new_zy)


if __name__ == "__main__":
    key = jax.random.PRNGKey(0)
    k_x, k_w, k_t = jax.random.split(key, 3)

    # Small but lane-aligned demo shapes (real ArcFace shapes would keep B and
    # the class tile multiples of 256 to fill the v6e/v7x 256-wide MXU).
    B, D, C = 16, 32, 512
    s, m1, m2, m3 = 64.0, 1.0, 0.5, 0.0

    x = jax.random.normal(k_x, (B, D), dtype=jnp.float32)
    weight = 0.001 * jax.random.normal(k_w, (D, C), dtype=jnp.float32)  # init std=0.001
    target = jax.random.randint(k_t, (B,), 0, C, dtype=jnp.int32)

    # c_tile=256 forces multi-tile streaming even at demo size.
    fc7, w_n, nemb = arc_linear_forward(x, weight, s=s, c_tile=256)
    loss = arc_loss_forward((fc7, w_n, nemb), target, m1=m1, m2=m2, m3=m3,
                            s=s, c_tile=256)
    jax.block_until_ready((fc7, w_n, nemb, loss))

    # Producer check vs exact f32 reference (tolerances cover the bf16 MXU feed;
    # the Newton-refined reciprocal keeps nembedding near-exact).
    fc7_r, w_n_r, nemb_r = _arc_linear_reference(x, weight, s=s)
    assert jnp.allclose(nemb, nemb_r, atol=5e-3, rtol=1e-3), "nembedding mismatch"
    assert jnp.allclose(w_n.astype(jnp.float32), w_n_r, atol=1e-2, rtol=1e-2), \
        "normalized weight mismatch"
    assert jnp.allclose(fc7, fc7_r, atol=5e-1, rtol=3e-2), "fc7 mismatch"

    # ArcLoss check: reference margin + cross-entropy on the *same* fc7 the
    # loss kernel consumed, isolating the ArcLoss math itself.
    loss_r = _arc_loss_reference(fc7, target, m1=m1, m2=m2, m3=m3, s=s)
    assert jnp.allclose(loss, loss_r, atol=5e-3, rtol=5e-3), "loss mismatch"

    print("KERNEL_OK")
</pallas_src>

<mosaic_0001>
module attributes {stable_mosaic.version = 11 : i64} {
  func.func @_l2norm_rows_kernel(%arg0: i32, %arg1: memref<16x32xf32, #tpu.memory_space<vmem>>, %arg2: memref<16x32xf32, #tpu.memory_space<vmem>>, %arg3: memref<16x32xbf16, #tpu.memory_space<vmem>>) attributes {dimension_semantics = [#tpu.dimension_semantics<parallel>], iteration_bounds = array<i64: 1>, scalar_prefetch = 0 : i64, scratch_operands = 0 : i64, tpu.core_type = #tpu.core_type<tc>, window_params = [{transform_indices = @transform_0, window_bounds = array<i64: 16, 32>}, {transform_indices = @transform_1, window_bounds = array<i64: 16, 32>}, {transform_indices = @transform_2, window_bounds = array<i64: 16, 32>}]} {
    %c0 = arith.constant 0 : index
    %c0_0 = arith.constant 0 : index
    %0 = vector.load %arg1[%c0, %c0_0] : memref<16x32xf32, #tpu.memory_space<vmem>>, vector<16x32xf32>
    %1 = arith.mulf %0, %0 : vector<16x32xf32>
    %cst = arith.constant dense<0.000000e+00> : vector<16xf32>
    %2 = vector.multi_reduction <add>, %1, %cst [1] : vector<16x32xf32> to vector<16xf32>
    %3 = vector.shape_cast %2 : vector<16xf32> to vector<16x1xf32>
    %4 = math.sqrt %3 : vector<16x1xf32>
    %cst_1 = arith.constant 9.99999974E-6 : f32
    %5 = vector.broadcast %cst_1 : f32 to vector<16x1xf32>
    %6 = arith.addf %4, %5 : vector<16x1xf32>
    %7 = tpu.reciprocal %6 {approx = true} : vector<16x1xf32> -> vector<16x1xf32>
    %8 = arith.mulf %6, %7 : vector<16x1xf32>
    %cst_2 = arith.constant 2.000000e+00 : f32
    %9 = vector.broadcast %cst_2 : f32 to vector<16x1xf32>
    %10 = arith.subf %9, %8 : vector<16x1xf32>
    %11 = arith.mulf %7, %10 : vector<16x1xf32>
    %cst_3 = arith.constant 6.400000e+01 : f32
    %12 = vector.broadcast %cst_3 : f32 to vector<16x1xf32>
    %13 = arith.mulf %11, %12 : vector<16x1xf32>
    %14 = vector.broadcast %13 : vector<16x1xf32> to vector<16x32xf32>
    %15 = arith.mulf %0, %14 : vector<16x32xf32>
    %c0_4 = arith.constant 0 : index
    %c0_5 = arith.constant 0 : index
    %16 = vector.load %arg2[%c0_4, %c0_5] : memref<16x32xf32, #tpu.memory_space<vmem>>, vector<16x32xf32>
    tpu.vector_store %arg2[%c0_4, %c0_5], %15 {strides = array<i32>} : memref<16x32xf32, #tpu.memory_space<vmem>>, vector<16x32xf32>,
    %17 = arith.truncf %15 : vector<16x32xf32> to vector<16x32xbf16>
    %c0_6 = arith.constant 0 : index
    %c0_7 = arith.constant 0 : index
    %18 = vector.load %arg3[%c0_6, %c0_7] : memref<16x32xbf16, #tpu.memory_space<vmem>>, vector<16x32xbf16>
    tpu.vector_store %arg3[%c0_6, %c0_7], %17 {strides = array<i32>} : memref<16x32xbf16, #tpu.memory_space<vmem>>, vector<16x32xbf16>,
    return
  }
  func.func @transform_0(%arg0: i32) -> (i32, i32) {
    %c0_i32 = arith.constant 0 : i32
    %c0_i32_0 = arith.constant 0 : i32
    return %arg0, %c0_i32 : i32, i32
  }
  func.func @transform_1(%arg0: i32) -> (i32, i32) {
    %c0_i32 = arith.constant 0 : i32
    %c0_i32_0 = arith.constant 0 : i32
    return %arg0, %c0_i32 : i32, i32
  }
  func.func @transform_2(%arg0: i32) -> (i32, i32) {
    %c0_i32 = arith.constant 0 : i32
    %c0_i32_0 = arith.constant 0 : i32
    return %arg0, %c0_i32 : i32, i32
  }
}

</mosaic_0001>

<llo_original>
// kernel: tpu_custom_call.1
$region0: #{tpu_custom_call.1}
  #allocation0 [shape = 'u32[]', space=smem, size = 0x4, offset = 0x4, fixed_abs, tag = 'smem constant byte address 0x4 - core index']
  #allocation1 [shape = 'u32[144,128]{1,0:T(1,128)}', space=vmem, size = 0x12000, scoped, tag = 'internal scratch']
  %s0 = inlined_call_operand.hbm [shape: f32[16,32], index: 0, kind: input, shape index: {}]
  %s1 = inlined_call_operand.hbm [shape: f32[16,32], index: 1, kind: output, shape index: {0}]
  %s2 = inlined_call_operand.hbm [shape: bf16[16,32], index: 2, kind: output, shape index: {1}]
  %3 = xla_tuple %s1, %s2
  %s4 = sld [smem:[#allocation0]]
  $region26: #{tpu_custom_call.1} parent=0
    _
  %s6 = ssub.s32 1, %s4
  %s7 = scalar_select 0, %s6, %s4
  $region1: #{tpu_custom_call.1} parent=0
    #allocation2 [shape = 'u8[8192]{0}', space=vmem, size = 0x2000, scoped, tag = 'input window, operand 0, single buffered']
    #allocation3 [shape = 's32[1]{0}', space=sflag, size = 0x4, scoped, tag = 'scoped memory for tpu_custom_call.1']
    #allocation4 [shape = 's32[1]{0}', space=sflag, size = 0x4, scoped, tag = 'scoped memory for tpu_custom_call.1']
    #allocation5 [shape = 'u8[8192]{0}', space=vmem, size = 0x2000, scoped, tag = 'output window, operand 0, single buffered']
    #allocation6 [shape = 'u8[4096]{0}', space=vmem, size = 0x1000, scoped, tag = 'output window, operand 1, single buffered']
    #allocation7 [shape = 's32[1]{0}', space=sflag, size = 0x4, scoped, tag = 'scoped memory for tpu_custom_call.1']
    %8 = vsyncpa [#allocation3], 0
    %9 = vsyncpa [#allocation4], 0
    %10 = vsyncpa [#allocation7], 0
    // Predicated region
    $region2: #{tpu_custom_call.1} parent=1 // pred_check
      _
    $region3: #{tpu_custom_call.1} parent=1 // pred_check_branch
      %12 = sbr.rel (0) target = $region5
    $region4: #{tpu_custom_call.1} parent=1 // pred_region
      %s14 = ssub.s32 256, 256
      %15 = vsyncadd [#allocation3], %s14
      %s16 = sshll.u32 [#allocation2], 4
      %s17 = int_to_ptr.vmem [resolvable:$true] %s16
      %22 = dma.hbm_to_vmem [thread:$0]  %s0, 256, %s17, [#allocation3], 128, 128, 8
    $region5: #{tpu_custom_call.1} parent=1 // pred_fallthru
      _
    // Predicated region
    $region6: #{tpu_custom_call.1} parent=1 // pred_check
      _
    $region7: #{tpu_custom_call.1} parent=1 // pred_check_branch
      %24 = sbr.rel (0) target = $region9
    $region8: #{tpu_custom_call.1} parent=1 // pred_region
      %25 = dma.done [#allocation3], 256
    $region9: #{tpu_custom_call.1} parent=1 // pred_fallthru
      _
    %v26 = vld [vmem:[#allocation2] sm:$0xff]
    %v27 = vld [vmem:[#allocation2 + $0x8] sm:$0xff]
    %v28 = vmul.f32 %v26, %v26
    %v29 = vmul.f32 %v27, %v27
    %vm30 = vcmask 261120
    %v31 = vsel %vm30, %v28, 0.0
    %32 = vadd.xlane.f32.xlu0 %v31
    %v33 = vpop.xlane.xlu0 %32
    %v34 = vsel %vm30, %v29, 0.0
    %35 = vadd.xlane.f32.xlu0 %v34
    %v36 = vpop.xlane.xlu0 %35
    %v37 = vrsqrt.pop %v33
    %v38 = vmul.f32 %v33, %v37
    %vm39 = vcmp.eq.f32.partialorder %v33, inf
    %v40 = vsel %vm39, %v33, %v38
    %vm41 = vcmp.eq.f32.partialorder %v33, 0.0
    %v42 = vand.u32 %v33, 2147483648
    %v43 = vsel %vm41, %v42, %v40
    %v44 = vrsqrt.pop %v36
    %v45 = vmul.f32 %v36, %v44
    %vm46 = vcmp.eq.f32.partialorder %v36, inf
    %v47 = vsel %vm46, %v36, %v45
    %vm48 = vcmp.eq.f32.partialorder %v36, 0.0
    %v49 = vand.u32 %v36, 2147483648
    %v50 = vsel %vm48, %v49, %v47
    %v51 = vadd.f32 %v43, 1e-05
    %v52 = vadd.f32 %v50, 1e-05
    %v53 = vrcp.pop %v51
    %v54 = vrcp.pop %v52
    %v55 = vmul.f32 %v51, %v53
    %v56 = vmul.f32 %v52, %v54
    %v57 = vsub.f32 2.0, %v55
    %v58 = vsub.f32 2.0, %v56
    %v59 = vmul.f32 %v53, %v57
    %v60 = vmul.f32 %v54, %v58
    %v61 = vmul.f32 %v59, 64.0
    %v62 = vmul.f32 %v60, 64.0
    %v63 = vmul.f32 %v26, %v61
    %v64 = vmul.f32 %v27, %v62
    %65 = vst.msk [vmem:[#allocation5] sm:$0xff] %vm30, %v63
    %66 = vst.msk [vmem:[#allocation5 + $0x8] sm:$0xff] %vm30, %v64
    %v67 = vpack.c.bf16 %v64, %v63
    %v69 = vunpack.c.l.b16 %v67
    %v70 = vunpack.c.h.b16 %v67
    %v71 = vpack.c.b16 %v69, %v69
    %v72 = vpack.c.b16 %v70, %v70
    %vm75 = vcmask 257024
    %76 = vst.msk [vmem:[#allocation6] sm:$0xf] %vm75, %v71
    %77 = vst.msk [vmem:[#allocation6 + $0x4] sm:$0xf] %vm75, %v72
    // Predicated region
    $region10: #{tpu_custom_call.1} parent=1 // pred_check
      _
    $region11: #{tpu_custom_call.1} parent=1 // pred_check_branch
      %79 = sbr.rel (0) target = $region13
    $region12: #{tpu_custom_call.1} parent=1 // pred_region
      %s81 = ssub.s32 256, 256
      %82 = vsyncadd [#allocation4], %s81
      %s83 = sshll.u32 [#allocation5], 4
      %s84 = int_to_ptr.vmem [resolvable:$true] %s83
      %89 = dma.vmem_to_hbm [thread:$0]  %s84, 256, %s1, [#allocation4], 128, 128, 8
    $region13: #{tpu_custom_call.1} parent=1 // pred_fallthru
      _
    // Predicated region
    $region14: #{tpu_custom_call.1} parent=1 // pred_check
      _
    $region15: #{tpu_custom_call.1} parent=1 // pred_check_branch
      %91 = sbr.rel (0) target = $region17
    $region16: #{tpu_custom_call.1} parent=1 // pred_region
      %s93 = ssub.s32 128, 128
      %94 = vsyncadd [#allocation7], %s93
      %s95 = sshll.u32 [#allocation6], 4
      %s96 = int_to_ptr.vmem [resolvable:$true] %s95
      %101 = dma.vmem_to_hbm [thread:$0]  %s96, 128, %s2, [#allocation7], 64, 64, 4
    $region17: #{tpu_custom_call.1} parent=1 // pred_fallthru
      _
    // Predicated region
    $region18: #{tpu_custom_call.1} parent=1 // pred_check
      _
    $region19: #{tpu_custom_call.1} parent=1 // pred_check_branch
      %103 = sbr.rel (0) target = $region21
    $region20: #{tpu_custom_call.1} parent=1 // pred_region
      %104 = dma.done [#allocation4], 256
    $region21: #{tpu_custom_call.1} parent=1 // pred_fallthru
      _
    // Predicated region
    $region22: #{tpu_custom_call.1} parent=1 // pred_check
      _
    $region23: #{tpu_custom_call.1} parent=1 // pred_check_branch
      %106 = sbr.rel (0) target = $region25
    $region24: #{tpu_custom_call.1} parent=1 // pred_region
      %107 = dma.done [#allocation7], 128
    $region25: #{tpu_custom_call.1} parent=1 // pred_fallthru
      _
    %108 = vsyncpa [#allocation3], 1
    %109 = vsyncpa [#allocation4], 1
    %110 = vsyncpa [#allocation7], 1

</llo_original>
